<compile_context>
chip_gen: v7x
topology: tpu7x:2x2x1
jax: 0.10.0
libtpu: 0.0.40
codegen_flags: <defaults>
</compile_context>

<pallas_src>
import functools

import jax
import jax.numpy as jnp
from jax import lax
from jax.experimental import pallas as pl
from jax.experimental.pallas import tpu as pltpu

HIDDEN = 768   # in_features of predict_head (fixed by the module)
OUT = 128      # out_features of predict_head (fixed by the module)


def _cdiv(a, b):
    return -(-a // b)


def _round_up(x, m):
    return _cdiv(x, m) * m


def _choose_tiles(M, tm_max, gran):
    """Pick (ntiles, tm) with tm a multiple of `gran`, bounded padding waste,
    and >=2 grid steps when M allows it (so v7x's 2 TCs both get work)."""
    ntiles = max(1, _cdiv(M, tm_max))
    if ntiles == 1 and M >= 2 * gran:
        ntiles = 2
    tm = _round_up(_cdiv(M, ntiles), gran)
    return ntiles, tm


# ---------------------------------------------------------------------------
# Path A: VMEM-resident table, exact one-hot MXU gather (small vocab).
# ---------------------------------------------------------------------------
def _vmem_head_kernel(ids_ref, emb_ref, w_ref, b_ref, o_ref, *, tm, vocab_p):
    # Exact row gather as a one-hot matmul on the MXU (robust alternative to a
    # dynamic in-kernel gather; 1.0 * bf16_row is exact).
    iota = lax.broadcasted_iota(jnp.int32, (tm, vocab_p), 1)
    onehot = jnp.where(ids_ref[...] == iota, 1.0, 0.0).astype(jnp.bfloat16)
    hidden = jnp.dot(onehot, emb_ref[...], preferred_element_type=jnp.float32)
    # hidden holds exact bf16 table values -> casting back to bf16 is lossless.
    acc = jnp.dot(hidden.astype(jnp.bfloat16), w_ref[...],
                  preferred_element_type=jnp.float32)
    o_ref[...] = (acc + b_ref[...]).astype(o_ref.dtype)


# ---------------------------------------------------------------------------
# Path B: HBM table, manual chunked DMA row-gather overlapped with the MXU.
# ---------------------------------------------------------------------------
def _hbm_head_kernel(ids_ref, emb_hbm, w_ref, b_ref, o_ref, x_vmem, sems,
                     *, tm, nchunk, unroll):
    cm = tm // nchunk                 # rows per chunk (multiple of `unroll`)
    base = pl.program_id(0) * tm

    def issue_chunk(c):
        # Issue cm row-gather DMAs for chunk c; all signal sems[c].
        @pl.loop(0, cm // unroll)
        def _issue(k):
            r0 = c * cm + k * unroll
            for u in range(unroll):   # static unroll: descriptor setup co-issues
                row = r0 + u
                tok = ids_ref[base + row]
                pltpu.make_async_copy(
                    emb_hbm.at[pl.ds(tok, 1), :],
                    x_vmem.at[pl.ds(row, 1), :],
                    sems.at[c],
                ).start()

    def wait_chunk(c):
        # ONE wait whose descriptor covers the whole chunk: the cm row copies
        # all signal sems[c], so a single chunk-sized wait drains their bytes.
        pltpu.make_async_copy(
            emb_hbm.at[pl.ds(0, cm), :],
            x_vmem.at[pl.ds(c * cm, cm), :],
            sems.at[c],
        ).wait()

    # Keep ~2 chunks of gathers in flight; matmul chunk c while chunk c+1 is
    # still landing and chunk c+2 is being issued.
    issue_chunk(0)
    if nchunk > 1:
        issue_chunk(1)
    for c in range(nchunk):
        if c + 2 < nchunk:
            issue_chunk(c + 2)
        wait_chunk(c)
        xc = x_vmem[pl.ds(c * cm, cm), :]                    # bf16, no cast needed
        acc = jnp.dot(xc, w_ref[...], preferred_element_type=jnp.float32)
        o_ref[pl.ds(c * cm, cm), :] = (acc + b_ref[...]).astype(o_ref.dtype)


# ---------------------------------------------------------------------------
# Wrapper
# ---------------------------------------------------------------------------
def blt_predict_head(input_ids_flat, embed_table, w_t, bias, *,
                     tm_max=1024, nchunk=4, unroll=8,
                     vmem_vocab_max=1024, vmem_table_max_bytes=3 << 20):
    """Fused (base-model-output gather + Linear 768->128) predict head.

    input_ids_flat: [M] int32 token ids
    embed_table:    [VOCAB, 768] stand-in hidden-state rows (stored bf16)
    w_t:            [768, 128]  (PyTorch Linear weight, pre-transposed)
    bias:           [1, 128] f32
    returns:        [M, 128] f32
    """
    M = int(input_ids_flat.shape[0])
    vocab, hidden = embed_table.shape
    assert hidden == HIDDEN and w_t.shape == (HIDDEN, OUT) and bias.shape == (1, OUT)

    emb_bf16 = embed_table.astype(jnp.bfloat16)    # bf16 table: halve gather bytes
    w_bf16 = w_t.astype(jnp.bfloat16)
    b_f32 = bias.astype(jnp.float32)

    table_bytes = vocab * HIDDEN * 2
    use_vmem_path = (vocab <= vmem_vocab_max) and (table_bytes <= vmem_table_max_bytes)

    if use_vmem_path:
        # ----- Path A: table resident in VMEM, one-hot MXU gather -----
        ntiles, tm = _choose_tiles(M, min(tm_max, 256), 8)
        m_pad = ntiles * tm
        ids2d = jnp.pad(input_ids_flat.astype(jnp.int32),
                        (0, m_pad - M)).reshape(m_pad, 1)
        vocab_p = _round_up(vocab, 128)            # lane-dense one-hot / aligned K
        emb_p = jnp.pad(emb_bf16, ((0, vocab_p - vocab), (0, 0)))

        kernel = functools.partial(_vmem_head_kernel, tm=tm, vocab_p=vocab_p)
        flops = 2 * m_pad * vocab_p * HIDDEN + 2 * m_pad * HIDDEN * OUT
        bytes_accessed = (vocab_p * HIDDEN * 2 + HIDDEN * OUT * 2 + OUT * 4
                          + m_pad * 4 + m_pad * OUT * 4)

        out = pl.pallas_call(
            kernel,
            out_shape=jax.ShapeDtypeStruct((m_pad, OUT), jnp.float32),
            grid=(ntiles,),
            in_specs=[
                pl.BlockSpec((tm, 1), lambda i: (i, 0)),            # ids tile
                pl.BlockSpec((vocab_p, HIDDEN), lambda i: (0, 0)),  # resident table
                pl.BlockSpec((HIDDEN, OUT), lambda i: (0, 0)),      # resident weight
                pl.BlockSpec((1, OUT), lambda i: (0, 0)),           # bias row
            ],
            out_specs=pl.BlockSpec((tm, OUT), lambda i: (i, 0)),
            compiler_params=pltpu.CompilerParams(
                dimension_semantics=("parallel",)),
            cost_estimate=pl.CostEstimate(
                flops=flops, transcendentals=0, bytes_accessed=bytes_accessed),
        )(ids2d, emb_p, w_bf16, b_f32)
        return out[:M]

    # ----- Path B: HBM table, chunked DMA gather overlapped with matmul -----
    gran = 8 * nchunk                              # chunk rows stay multiples of 8
    ntiles, tm = _choose_tiles(M, tm_max, gran)
    m_pad = ntiles * tm
    cm = tm // nchunk
    assert cm % unroll == 0 and vocab >= cm

    ids = jnp.pad(input_ids_flat.astype(jnp.int32), (0, m_pad - M))  # pad -> row 0

    kernel = functools.partial(_hbm_head_kernel, tm=tm, nchunk=nchunk, unroll=unroll)
    flops = 2 * m_pad * HIDDEN * OUT
    bytes_accessed = (m_pad * HIDDEN * 2        # gathered bf16 hidden rows
                      + HIDDEN * OUT * 2        # resident bf16 weight
                      + OUT * 4                 # bias
                      + m_pad * 4               # ids
                      + m_pad * OUT * 4)        # f32 output

    out = pl.pallas_call(
        kernel,
        out_shape=jax.ShapeDtypeStruct((m_pad, OUT), jnp.float32),
        grid_spec=pltpu.PrefetchScalarGridSpec(
            num_scalar_prefetch=1,                                    # ids -> SMEM
            grid=(ntiles,),
            in_specs=[
                pl.BlockSpec(memory_space=pl.ANY),                    # table stays in HBM
                pl.BlockSpec((HIDDEN, OUT), lambda i, ids: (0, 0)),   # resident weight
                pl.BlockSpec((1, OUT), lambda i, ids: (0, 0)),        # bias row
            ],
            out_specs=pl.BlockSpec((tm, OUT), lambda i, ids: (i, 0)),
            scratch_shapes=[
                pltpu.VMEM((tm, HIDDEN), jnp.bfloat16),               # gathered x tile
                pltpu.SemaphoreType.DMA((nchunk,)),                   # one sem per chunk
            ],
        ),
        compiler_params=pltpu.CompilerParams(
            dimension_semantics=("parallel",)),
        cost_estimate=pl.CostEstimate(
            flops=flops, transcendentals=0, bytes_accessed=bytes_accessed),
    )(ids, emb_bf16, w_bf16, b_f32)
    return out[:M]


def blt_model_forward(input_ids, params):
    """Full BLTModel.forward: stand-in base model + fused Pallas predict head."""
    B, S = input_ids.shape
    out = blt_predict_head(
        input_ids.reshape(B * S),
        params["embed_table"],
        params["head_w_t"],
        params["head_b"],
    )
    return out.reshape(B, S, OUT)


if __name__ == "__main__":
    key = jax.random.PRNGKey(0)
    k_emb, k_w, k_b, k_ids, k_emb2, k_ids2 = jax.random.split(key, 6)

    # Shared predict_head params (PyTorch Linear weight is [128,768]; stored transposed).
    head_w_t = (jax.random.normal(k_w, (HIDDEN, OUT), jnp.float32)
                * (1.0 / jnp.sqrt(HIDDEN))).astype(jnp.bfloat16)
    head_b = jax.random.normal(k_b, (1, OUT), jnp.float32) * 0.01
    w_f32 = head_w_t.astype(jnp.float32)

    # ---- Config 1: small vocab -> VMEM-resident one-hot gather path ----
    B, S, VOCAB = 2, 8, 64
    emb1 = (jax.random.normal(k_emb, (VOCAB, HIDDEN), jnp.float32) * 0.02
            ).astype(jnp.bfloat16)
    params1 = {"embed_table": emb1, "head_w_t": head_w_t, "head_b": head_b}
    ids1 = jax.random.randint(k_ids, (B, S), 0, VOCAB, dtype=jnp.int32)

    out1 = jax.block_until_ready(blt_model_forward(ids1, params1))
    assert out1.shape == (B, S, OUT), out1.shape
    ref1 = (jnp.take(emb1, ids1, axis=0).astype(jnp.float32) @ w_f32) + head_b[0]
    assert jnp.allclose(out1, ref1, atol=1e-2, rtol=1e-2), "mismatch (VMEM path)"

    # ---- Config 2: larger vocab -> HBM DMA-gather path ----
    B2, S2, VOCAB2 = 2, 160, 8192
    emb2 = (jax.random.normal(k_emb2, (VOCAB2, HIDDEN), jnp.float32) * 0.02
            ).astype(jnp.bfloat16)
    params2 = {"embed_table": emb2, "head_w_t": head_w_t, "head_b": head_b}
    ids2 = jax.random.randint(k_ids2, (B2, S2), 0, VOCAB2, dtype=jnp.int32)

    out2 = jax.block_until_ready(blt_model_forward(ids2, params2))
    assert out2.shape == (B2, S2, OUT), out2.shape
    ref2 = (jnp.take(emb2, ids2, axis=0).astype(jnp.float32) @ w_f32) + head_b[0]
    assert jnp.allclose(out2, ref2, atol=1e-2, rtol=1e-2), "mismatch (HBM path)"

    print("KERNEL_OK")
</pallas_src>

<mosaic_0001>
module attributes {stable_mosaic.version = 11 : i64} {
  func.func @_vmem_head_kernel(%arg0: i32, %arg1: memref<8x1xi32, #tpu.memory_space<vmem>>, %arg2: memref<128x768xbf16, #tpu.memory_space<vmem>>, %arg3: memref<768x128xbf16, #tpu.memory_space<vmem>>, %arg4: memref<1x128xf32, #tpu.memory_space<vmem>>, %arg5: memref<8x128xf32, #tpu.memory_space<vmem>>) attributes {dimension_semantics = [#tpu.dimension_semantics<parallel>], iteration_bounds = array<i64: 2>, scalar_prefetch = 0 : i64, scratch_operands = 0 : i64, tpu.core_type = #tpu.core_type<tc>, window_params = [{transform_indices = @transform_0, window_bounds = array<i64: 8, 1>}, {pipeline_mode = #tpu.pipeline_mode<synchronous>, transform_indices = @transform_1, window_bounds = array<i64: 128, 768>}, {pipeline_mode = #tpu.pipeline_mode<synchronous>, transform_indices = @transform_2, window_bounds = array<i64: 768, 128>}, {pipeline_mode = #tpu.pipeline_mode<synchronous>, transform_indices = @transform_3, window_bounds = array<i64: 1, 128>}, {transform_indices = @transform_4, window_bounds = array<i64: 8, 128>}]} {
    %0 = tpu.iota {dimensions = array<i32: 1>} : vector<8x128xi32>
    %c0 = arith.constant 0 : index
    %c0_0 = arith.constant 0 : index
    %1 = vector.load %arg1[%c0, %c0_0] : memref<8x1xi32, #tpu.memory_space<vmem>>, vector<8x1xi32>
    %2 = vector.broadcast %1 : vector<8x1xi32> to vector<8x128xi32>
    %3 = arith.cmpi eq, %2, %0 : vector<8x128xi32>
    %cst = arith.constant 1.000000e+00 : f32
    %cst_1 = arith.constant 0.000000e+00 : f32
    %4 = vector.broadcast %cst : f32 to vector<8x128xf32>
    %5 = vector.broadcast %cst_1 : f32 to vector<8x128xf32>
    %6 = arith.select %3, %4, %5 : vector<8x128xi1>, vector<8x128xf32>
    %7 = arith.truncf %6 : vector<8x128xf32> to vector<8x128xbf16>
    %c0_2 = arith.constant 0 : index
    %c0_3 = arith.constant 0 : index
    %8 = vector.load %arg2[%c0_2, %c0_3] : memref<128x768xbf16, #tpu.memory_space<vmem>>, vector<128x768xbf16>
    %cst_4 = arith.constant dense<0.000000e+00> : vector<8x768xf32>
    %9 = tpu.matmul %7, %8, %cst_4 {dimension_numbers = #tpu.dot_dimension_numbers<[1], [0], [0], [1], [0, 0, 1, 1], [], []>} : vector<8x128xbf16>, vector<128x768xbf16>, vector<8x768xf32> -> vector<8x768xf32>
    %10 = arith.truncf %9 : vector<8x768xf32> to vector<8x768xbf16>
    %c0_5 = arith.constant 0 : index
    %c0_6 = arith.constant 0 : index
    %11 = vector.load %arg3[%c0_5, %c0_6] : memref<768x128xbf16, #tpu.memory_space<vmem>>, vector<768x128xbf16>
    %cst_7 = arith.constant dense<0.000000e+00> : vector<8x128xf32>
    %12 = tpu.matmul %10, %11, %cst_7 {dimension_numbers = #tpu.dot_dimension_numbers<[1], [0], [0], [1], [0, 0, 1, 1], [], []>} : vector<8x768xbf16>, vector<768x128xbf16>, vector<8x128xf32> -> vector<8x128xf32>
    %c0_8 = arith.constant 0 : index
    %c0_9 = arith.constant 0 : index
    %13 = vector.load %arg4[%c0_8, %c0_9] : memref<1x128xf32, #tpu.memory_space<vmem>>, vector<1x128xf32>
    %14 = vector.broadcast %13 : vector<1x128xf32> to vector<8x128xf32>
    %15 = arith.addf %12, %14 : vector<8x128xf32>
    %c0_10 = arith.constant 0 : index
    %c0_11 = arith.constant 0 : index
    %16 = vector.load %arg5[%c0_10, %c0_11] : memref<8x128xf32, #tpu.memory_space<vmem>>, vector<8x128xf32>
    tpu.vector_store %arg5[%c0_10, %c0_11], %15 {strides = array<i32>} : memref<8x128xf32, #tpu.memory_space<vmem>>, vector<8x128xf32>,
    return
  }
  func.func @transform_0(%arg0: i32) -> (i32, i32) {
    %c0_i32 = arith.constant 0 : i32
    %c0_i32_0 = arith.constant 0 : i32
    return %arg0, %c0_i32 : i32, i32
  }
  func.func @transform_1(%arg0: i32) -> (i32, i32) {
    %c0_i32 = arith.constant 0 : i32
    %c0_i32_0 = arith.constant 0 : i32
    %c0_i32_1 = arith.constant 0 : i32
    return %c0_i32, %c0_i32_0 : i32, i32
  }
  func.func @transform_2(%arg0: i32) -> (i32, i32) {
    %c0_i32 = arith.constant 0 : i32
    %c0_i32_0 = arith.constant 0 : i32
    %c0_i32_1 = arith.constant 0 : i32
    return %c0_i32, %c0_i32_0 : i32, i32
  }
  func.func @transform_3(%arg0: i32) -> (i32, i32) {
    %c0_i32 = arith.constant 0 : i32
    %c0_i32_0 = arith.constant 0 : i32
    %c0_i32_1 = arith.constant 0 : i32
    return %c0_i32, %c0_i32_0 : i32, i32
  }
  func.func @transform_4(%arg0: i32) -> (i32, i32) {
    %c0_i32 = arith.constant 0 : i32
    %c0_i32_0 = arith.constant 0 : i32
    return %arg0, %c0_i32 : i32, i32
  }
}

</mosaic_0001>

<llo_original>
// kernel: tpu_custom_call.1
$region0: #{tpu_custom_call.1}
  #allocation0 [shape = 'u32[]', space=smem, size = 0x4, offset = 0x4, fixed_abs, tag = 'smem constant byte address 0x4 - core index']
  #allocation1 [shape = 'u32[144,128]{1,0:T(1,128)}', space=vmem, size = 0x12000, scoped, tag = 'internal scratch']
  %s0 = inlined_call_operand.vmem [shape: s32[16,1], index: 0, kind: input, shape index: {}]
  %s1 = inlined_call_operand.hbm [shape: bf16[128,768], index: 1, kind: input, shape index: {}]
  %s2 = inlined_call_operand.hbm [shape: bf16[768,128], index: 2, kind: input, shape index: {}]
  %s3 = inlined_call_operand.vmem [shape: f32[1,128], index: 3, kind: input, shape index: {}]
  %s4 = inlined_call_operand.hbm [shape: f32[16,128], index: 4, kind: output, shape index: {}]
  %s5 = sld [smem:[#allocation0]]
  $region57: #{tpu_custom_call.1} parent=0
    _
  %s7 = ssub.s32 1, %s5
  %s8 = scalar_select 0, %s7, %s5
  $region1: #{tpu_custom_call.1} parent=0
    #allocation2 [shape = 'u8[196608]{0}', space=vmem, size = 0x30000, scoped, tag = 'input window, operand 1, single buffered']
    #allocation3 [shape = 's32[2]{0}', space=sflag, size = 0x8, scoped, tag = 'scoped memory for tpu_custom_call.1']
    #allocation4 [shape = 's32[2]{0}', space=sflag, size = 0x8, scoped, tag = 'scoped memory for tpu_custom_call.1']
    #allocation5 [shape = 'u8[196608]{0}', space=vmem, size = 0x30000, scoped, tag = 'input window, operand 2, single buffered']
    #allocation6 [shape = 's32[1]{0}', space=sflag, size = 0x4, scoped, tag = 'scoped memory for tpu_custom_call.1']
    #allocation7 [shape = 'u8[8192]{0}', space=vmem, size = 0x2000, scoped, tag = 'output window, operand 0']
    %9 = vsyncpa [#allocation3], 0
    %10 = vsyncpa [#allocation6], 0
    %11 = vsyncpa [#allocation4], 0
    %s12 = scalar_lea.sflag [#allocation4], 1
    %13 = vsyncpa %s12, 0
    loop: start=0, step=1, limit=4
    $region2: #{tpu_custom_call.1} parent=1 // loop_pre_header
      _
    $region3: #{tpu_custom_call.1} parent=1 // loop_header
      %s15 = sphi 0, %s19
      %p16 = scmp.ge.s32.totalorder %s15, 4
      %s25 = sphi 0, %s27
      %s28 = sphi 0, %s25
      %s29 = sphi 0, %s28
      %s45 = sphi 0, %s29
      %s49 = sphi 0, %s49
      %s51 = sphi 0, %s49
      %s52 = sphi 0, %s51
      %s66 = sphi 0, %s52
      %s70 = sphi 0, %s70
      %s72 = sphi 0, %s70
      %s73 = sphi 0, %s72
      %s87 = sphi 0, %s73
      %s91 = sphi 0, %s91
      %s93 = sphi 0, %s91
      %s94 = sphi 0, %s93
      %s108 = sphi 0, %s94
      %s114 = sphi 0, %s116
      %s117 = sphi 0, %s114
      %s118 = sphi 0, %s117
      %s134 = sphi 0, %s118
    $region4: #{tpu_custom_call.1} parent=1 // loop_header_branch
      %18 = sbr.rel (%p16) target = $region8
    $region5: #{tpu_custom_call.1} parent=1 // loop_body
      %s20 = ssub.s32 %s15, 1
      %s21 = ssub.s32 %s15, 2
      %s22 = sadd.s32 %s15, 1
      %s23 = ssub.s32 %s15, %s22
      %p24 = scmp.eq.s32.totalorder %s23, 0
      %s26 = sadd.s32 %s25, 1
      %s27 = scalar_select %p24, %s25, %s26
      %p30 = pneg %p24
      %p31 = scmp.eq.s32.totalorder %s15, 1
      %p32 = por %p30, %p31
      %p33 = scmp.ne.s32.totalorder %s25, %s28
      %p34 = scmp.eq.s32.totalorder %s15, 0
      %p35 = por %p33, %p34
      %p36 = scmp.ne.s32.totalorder %s25, %s28
      %p37 = scmp.eq.s32.totalorder %s20, 1
      %p38 = por %p36, %p37
      %p39 = scmp.ne.s32.totalorder %s28, %s29
      %p40 = scmp.eq.s32.totalorder %s20, 0
      %p41 = por %p39, %p40
      %p42 = scmp.ne.s32.totalorder %s28, %s29
      %p43 = scmp.eq.s32.totalorder %s21, 1
      %p44 = por %p42, %p43
      %p46 = scmp.ne.s32.totalorder %s29, %s45
      %p47 = scmp.eq.s32.totalorder %s21, 0
      %p48 = por %p46, %p47
      %s50 = sadd.s32 %s49, 1
      %p53 = scmp.eq.s32.totalorder %s15, 1
      %p54 = scmp.ne.s32.totalorder %s49, %s51
      %p55 = scmp.eq.s32.totalorder %s15, 0
      %p56 = por %p54, %p55
      %p57 = scmp.ne.s32.totalorder %s49, %s51
      %p58 = scmp.eq.s32.totalorder %s20, 1
      %p59 = por %p57, %p58
      %p60 = scmp.ne.s32.totalorder %s51, %s52
      %p61 = scmp.eq.s32.totalorder %s20, 0
      %p62 = por %p60, %p61
      %p63 = scmp.ne.s32.totalorder %s51, %s52
      %p64 = scmp.eq.s32.totalorder %s21, 1
      %p65 = por %p63, %p64
      %p67 = scmp.ne.s32.totalorder %s52, %s66
      %p68 = scmp.eq.s32.totalorder %s21, 0
      %p69 = por %p67, %p68
      %s71 = sadd.s32 %s70, 1
      %p74 = scmp.eq.s32.totalorder %s15, 1
      %p75 = scmp.ne.s32.totalorder %s70, %s72
      %p76 = scmp.eq.s32.totalorder %s15, 0
      %p77 = por %p75, %p76
      %p78 = scmp.ne.s32.totalorder %s70, %s72
      %p79 = scmp.eq.s32.totalorder %s20, 1
      %p80 = por %p78, %p79
      %p81 = scmp.ne.s32.totalorder %s72, %s73
      %p82 = scmp.eq.s32.totalorder %s20, 0
      %p83 = por %p81, %p82
      %p84 = scmp.ne.s32.totalorder %s72, %s73
      %p85 = scmp.eq.s32.totalorder %s21, 1
      %p86 = por %p84, %p85
      %p88 = scmp.ne.s32.totalorder %s73, %s87
      %p89 = scmp.eq.s32.totalorder %s21, 0
      %p90 = por %p88, %p89
      %s92 = sadd.s32 %s91, 1
      %p95 = scmp.eq.s32.totalorder %s15, 1
      %p96 = scmp.ne.s32.totalorder %s91, %s93
      %p97 = scmp.eq.s32.totalorder %s15, 0
      %p98 = por %p96, %p97
      %p99 = scmp.ne.s32.totalorder %s91, %s93
      %p100 = scmp.eq.s32.totalorder %s20, 1
      %p101 = por %p99, %p100
      %p102 = scmp.ne.s32.totalorder %s93, %s94
      %p103 = scmp.eq.s32.totalorder %s20, 0
      %p104 = por %p102, %p103
      %p105 = scmp.ne.s32.totalorder %s93, %s94
      %p106 = scmp.eq.s32.totalorder %s21, 1
      %p107 = por %p105, %p106
      %p109 = scmp.ne.s32.totalorder %s94, %s108
      %p110 = scmp.eq.s32.totalorder %s21, 0
      %p111 = por %p109, %p110
      %s112 = ssub.s32 %s15, %s22
      %p113 = scmp.eq.s32.totalorder %s112, 0
      %s115 = sadd.s32 %s114, 1
      %s116 = scalar_select %p113, %s114, %s115
      %p119 = pneg %p113
      %p120 = scmp.eq.s32.totalorder %s15, 1
      %p121 = por %p119, %p120
      %p122 = scmp.ne.s32.totalorder %s114, %s117
      %p123 = scmp.eq.s32.totalorder %s15, 0
      %p124 = por %p122, %p123
      %p125 = scmp.ne.s32.totalorder %s114, %s117
      %p126 = scmp.eq.s32.totalorder %s20, 1
      %p127 = por %p125, %p126
      %p128 = scmp.ne.s32.totalorder %s117, %s118
      %p129 = scmp.eq.s32.totalorder %s20, 0
      %p130 = por %p128, %p129
      %p131 = scmp.ne.s32.totalorder %s117, %s118
      %p132 = scmp.eq.s32.totalorder %s21, 1
      %p133 = por %p131, %p132
      %p135 = scmp.ne.s32.totalorder %s118, %s134
      %p136 = scmp.eq.s32.totalorder %s21, 0
      %p137 = por %p135, %p136
      %p138 = scmp.le.s32.totalorder 1, %s15
      %p139 = scmp.lt.s32.totalorder %s15, 3
      %p140 = pnand %p138, %p139
      %p141 = pneg %p140
      // Predicated region
      $region9: #{tpu_custom_call.1} parent=5 // pred_check
        _
      $region10: #{tpu_custom_call.1} parent=5 // pred_check_branch
        %143 = sbr.rel (%p140) target = $region12
      $region11: #{tpu_custom_call.1} parent=5 // pred_region
        %s144 = ssub.s32 %s15, 1
        // Predicated region
        $region13: #{tpu_custom_call.1} parent=11 // pred_check
          %p145 = pneg %p62
        $region14: #{tpu_custom_call.1} parent=11 // pred_check_branch
          %147 = sbr.rel (%p145) target = $region16
        $region15: #{tpu_custom_call.1} parent=11 // pred_region
          %s149 = ssub.s32 6144, 6144
          %150 = vsyncadd [#allocation3], %s149
          %s151 = sshll.u32 [#allocation2], 4
          %s152 = int_to_ptr.vmem [resolvable:$true] %s151
          %157 = dma.hbm_to_vmem [thread:$0]  %s1, 6144, %s152, [#allocation3], 384, 384, 24
        $region16: #{tpu_custom_call.1} parent=11 // pred_fallthru
          _
        // Predicated region
        $region17: #{tpu_custom_call.1} parent=11 // pred_check
          %p158 = pneg %p83
        $region18: #{tpu_custom_call.1} parent=11 // pred_check_branch
          %160 = sbr.rel (%p158) target = $region20
        $region19: #{tpu_custom_call.1} parent=11 // pred_region
          %s162 = ssub.s32 6144, 6144
          %163 = vsyncadd [#allocation6], %s162
          %s164 = sshll.u32 [#allocation5], 4
          %s165 = int_to_ptr.vmem [resolvable:$true] %s164
          %170 = dma.hbm_to_vmem [thread:$0]  %s2, 6144, %s165, [#allocation6], 64, 64, 4
        $region20: #{tpu_custom_call.1} parent=11 // pred_fallthru
          _
        // Predicated region
        $region21: #{tpu_custom_call.1} parent=11 // pred_check
          %p171 = pneg %p104
        $region22: #{tpu_custom_call.1} parent=11 // pred_check_branch
          %173 = sbr.rel (%p171) target = $region24
        $region23: #{tpu_custom_call.1} parent=11 // pred_region
          _
        $region24: #{tpu_custom_call.1} parent=11 // pred_fallthru
          _
      $region12: #{tpu_custom_call.1} parent=5 // pred_fallthru
        _
      %p174 = scmp.lt.s32.totalorder %s15, 2
      // Predicated region
      $region25: #{tpu_custom_call.1} parent=5 // pred_check
        %p175 = pneg %p174
      $region26: #{tpu_custom_call.1} parent=5 // pred_check_branch
        %177 = sbr.rel (%p175) target = $region28
      $region27: #{tpu_custom_call.1} parent=5 // pred_region
        // Predicated region
        $region29: #{tpu_custom_call.1} parent=27 // pred_check
          %p178 = pneg %p35
        $region30: #{tpu_custom_call.1} parent=27 // pred_check_branch
          %180 = sbr.rel (%p178) target = $region32
        $region31: #{tpu_custom_call.1} parent=27 // pred_region
          %p181 = scmp.lt.s32.totalorder %s15, 1
          %s182 = scalar_select %p181, %s15, 1
          %s183 = smul.addr %s182, 8
          %s184 = scalar_lea.vmem %s0, %s183
        $region32: #{tpu_custom_call.1} parent=27 // pred_fallthru
          _
      $region28: #{tpu_custom_call.1} parent=5 // pred_fallthru
        _
      %p185 = scmp.le.s32.totalorder 1, %s15
      %p186 = scmp.lt.s32.totalorder %s15, 3
      %p187 = pnand %p185, %p186
      %p188 = pneg %p187
      // Predicated region
      $region33: #{tpu_custom_call.1} parent=5 // pred_check
        _
      $region34: #{tpu_custom_call.1} parent=5 // pred_check_branch
        %190 = sbr.rel (%p187) target = $region36
      $region35: #{tpu_custom_call.1} parent=5 // pred_region
        %s191 = ssub.s32 %s15, 1
        // Predicated region
        $region37: #{tpu_custom_call.1} parent=35 // pred_check
          %p192 = pneg %p62
        $region38: #{tpu_custom_call.1} parent=35 // pred_check_branch
          %194 = sbr.rel (%p192) target = $region40
        $region39: #{tpu_custom_call.1} parent=35 // pred_region
          %195 = dma.done [#allocation3], 6144
        $region40: #{tpu_custom_call.1} parent=35 // pred_fallthru
          _
        // Predicated region
        $region41: #{tpu_custom_call.1} parent=35 // pred_check
          %p196 = pneg %p83
        $region42: #{tpu_custom_call.1} parent=35 // pred_check_branch
          %198 = sbr.rel (%p196) target = $region44
        $region43: #{tpu_custom_call.1} parent=35 // pred_region
          %199 = dma.done [#allocation6], 6144
        $region44: #{tpu_custom_call.1} parent=35 // pred_fallthru
          _
        %p200 = scmp.lt.s32.totalorder %s20, 1
        %s201 = scalar_select %p200, %s20, 1
        %s202 = smul.addr %s201, 8
        %s203 = scalar_lea.vmem %s0, %s202
        %p204 = pneg %p41
        %p205 = pneg %p38
        %p206 = pneg %p62
        %p207 = pneg %p59
        %p208 = pneg %p83
        %p209 = pneg %p80
        %p210 = pneg %p104
        %p211 = pneg %p101
        %p212 = pneg %p130
        %p213 = pneg %p127
        %s214 = sand.u32 %s117, 1
        %s215 = scalar_lea.sflag [#allocation4], %s214
        %s216 = sand.u32 %s117, 1
        %s217 = smul.addr %s216, 8
        %s218 = scalar_lea.vmem [#allocation7], %s217
        %p219 = scmp.lt.s32.totalorder %s20, 1
        %s220 = scalar_select %p219, %s20, 1
        %s221 = smul.addr %s220, 8
        %s222 = scalar_lea.vmem %s0, %s221
        %v224 = vlaneseq
        %v225 = vand.u32 %v224, 127
        %v226 = vld [vmem:[%s222] sm:$0xff]
        %227 = vset.pattern.permute.xlu0 0
        %228 = vperm.xlu0 %227, %v226
        %v229 = vpop.permute.xlu0 %228
        %vm230 = vcmp.eq.s32.totalorder %v229, %v225
        %v231 = vsel %vm230, 1.0, 0.0
        %v232 = vpack.c.bf16 %v231, %v231
        %v233 = vld [vmem:[#allocation2] sm:$0xff]
        %v234 = vld [vmem:[#allocation2 + $0x8] sm:$0xff]
        %v235 = vld [vmem:[#allocation2 + $0x10] sm:$0xff]
        %v236 = vld [vmem:[#allocation2 + $0x18] sm:$0xff]
        %v237 = vld [vmem:[#allocation2 + $0x20] sm:$0xff]
        %v238 = vld [vmem:[#allocation2 + $0x28] sm:$0xff]
        %v239 = vld [vmem:[#allocation2 + $0x30] sm:$0xff]
        %v240 = vld [vmem:[#allocation2 + $0x38] sm:$0xff]
        %v241 = vld [vmem:[#allocation2 + $0x40] sm:$0xff]
        %v242 = vld [vmem:[#allocation2 + $0x48] sm:$0xff]
        %v243 = vld [vmem:[#allocation2 + $0x50] sm:$0xff]
        %v244 = vld [vmem:[#allocation2 + $0x58] sm:$0xff]
        %v245 = vld [vmem:[#allocation2 + $0x60] sm:$0xff]
        %v246 = vld [vmem:[#allocation2 + $0x68] sm:$0xff]
        %v247 = vld [vmem:[#allocation2 + $0x70] sm:$0xff]
        %v248 = vld [vmem:[#allocation2 + $0x78] sm:$0xff]
        %v249 = vld [vmem:[#allocation2 + $0x80] sm:$0xff]
        %v250 = vld [vmem:[#allocation2 + $0x88] sm:$0xff]
        %v251 = vld [vmem:[#allocation2 + $0x90] sm:$0xff]
        %v252 = vld [vmem:[#allocation2 + $0x98] sm:$0xff]
        %v253 = vld [vmem:[#allocation2 + $0xa0] sm:$0xff]
        %v254 = vld [vmem:[#allocation2 + $0xa8] sm:$0xff]
        %v255 = vld [vmem:[#allocation2 + $0xb0] sm:$0xff]
        %v256 = vld [vmem:[#allocation2 + $0xb8] sm:$0xff]
        %v257 = vld [vmem:[#allocation2 + $0xc0] sm:$0xff]
        %v258 = vld [vmem:[#allocation2 + $0xc8] sm:$0xff]
        %v259 = vld [vmem:[#allocation2 + $0xd0] sm:$0xff]
        %v260 = vld [vmem:[#allocation2 + $0xd8] sm:$0xff]
        %v261 = vld [vmem:[#allocation2 + $0xe0] sm:$0xff]
        %v262 = vld [vmem:[#allocation2 + $0xe8] sm:$0xff]
        %v263 = vld [vmem:[#allocation2 + $0xf0] sm:$0xff]
        %v264 = vld [vmem:[#allocation2 + $0xf8] sm:$0xff]
        %v265 = vld [vmem:[#allocation2 + $0x100] sm:$0xff]
        %v266 = vld [vmem:[#allocation2 + $0x108] sm:$0xff]
        %v267 = vld [vmem:[#allocation2 + $0x110] sm:$0xff]
        %v268 = vld [vmem:[#allocation2 + $0x118] sm:$0xff]
        %v269 = vld [vmem:[#allocation2 + $0x120] sm:$0xff]
        %v270 = vld [vmem:[#allocation2 + $0x128] sm:$0xff]
        %v271 = vld [vmem:[#allocation2 + $0x130] sm:$0xff]
        %v272 = vld [vmem:[#allocation2 + $0x138] sm:$0xff]
        %v273 = vld [vmem:[#allocation2 + $0x140] sm:$0xff]
        %v274 = vld [vmem:[#allocation2 + $0x148] sm:$0xff]
        %v275 = vld [vmem:[#allocation2 + $0x150] sm:$0xff]
        %v276 = vld [vmem:[#allocation2 + $0x158] sm:$0xff]
        %v277 = vld [vmem:[#allocation2 + $0x160] sm:$0xff]
        %v278 = vld [vmem:[#allocation2 + $0x168] sm:$0xff]
        %v279 = vld [vmem:[#allocation2 + $0x170] sm:$0xff]
        %v280 = vld [vmem:[#allocation2 + $0x178] sm:$0xff]
        %v329 = vunpack.c.l.b16 %v233
        %v330 = vunpack.c.h.b16 %v233
        %v331 = vunpack.c.l.b16 %v234
        %v332 = vunpack.c.h.b16 %v234
        %v333 = vunpack.c.l.b16 %v235
        %v334 = vunpack.c.h.b16 %v235
        %v335 = vunpack.c.l.b16 %v236
        %v336 = vunpack.c.h.b16 %v236
        %v337 = vunpack.c.l.b16 %v237
        %v338 = vunpack.c.h.b16 %v237
        %v339 = vunpack.c.l.b16 %v238
        %v340 = vunpack.c.h.b16 %v238
        %v341 = vunpack.c.l.b16 %v239
        %v342 = vunpack.c.h.b16 %v239
        %v343 = vunpack.c.l.b16 %v240
        %v344 = vunpack.c.h.b16 %v240
        %v345 = vunpack.c.l.b16 %v241
        %v346 = vunpack.c.h.b16 %v241
        %v347 = vunpack.c.l.b16 %v242
        %v348 = vunpack.c.h.b16 %v242
        %v349 = vunpack.c.l.b16 %v243
        %v350 = vunpack.c.h.b16 %v243
        %v351 = vunpack.c.l.b16 %v244
        %v352 = vunpack.c.h.b16 %v244
        %v353 = vunpack.c.l.b16 %v245
        %v354 = vunpack.c.h.b16 %v245
        %v355 = vunpack.c.l.b16 %v246
        %v356 = vunpack.c.h.b16 %v246
        %v357 = vunpack.c.l.b16 %v247
        %v358 = vunpack.c.h.b16 %v247
        %v359 = vunpack.c.l.b16 %v248
        %v360 = vunpack.c.h.b16 %v248
        %v361 = vunpack.c.l.b16 %v249
        %v362 = vunpack.c.h.b16 %v249
        %v363 = vunpack.c.l.b16 %v250
        %v364 = vunpack.c.h.b16 %v250
        %v365 = vunpack.c.l.b16 %v251
        %v366 = vunpack.c.h.b16 %v251
        %v367 = vunpack.c.l.b16 %v252
        %v368 = vunpack.c.h.b16 %v252
        %v369 = vunpack.c.l.b16 %v253
        %v370 = vunpack.c.h.b16 %v253
        %v371 = vunpack.c.l.b16 %v254
        %v372 = vunpack.c.h.b16 %v254
        %v373 = vunpack.c.l.b16 %v255
        %v374 = vunpack.c.h.b16 %v255
        %v375 = vunpack.c.l.b16 %v256
        %v376 = vunpack.c.h.b16 %v256
        %v377 = vunpack.c.l.b16 %v257
        %v378 = vunpack.c.h.b16 %v257
        %v379 = vunpack.c.l.b16 %v258
        %v380 = vunpack.c.h.b16 %v258
        %v381 = vunpack.c.l.b16 %v259
        %v382 = vunpack.c.h.b16 %v259
        %v383 = vunpack.c.l.b16 %v260
        %v384 = vunpack.c.h.b16 %v260
        %v385 = vunpack.c.l.b16 %v261
        %v386 = vunpack.c.h.b16 %v261
        %v387 = vunpack.c.l.b16 %v262
        %v388 = vunpack.c.h.b16 %v262
        %v389 = vunpack.c.l.b16 %v263
        %v390 = vunpack.c.h.b16 %v263
        %v391 = vunpack.c.l.b16 %v264
        %v392 = vunpack.c.h.b16 %v264
        %v393 = vunpack.c.l.b16 %v265
        %v394 = vunpack.c.h.b16 %v265
        %v395 = vunpack.c.l.b16 %v266
        %v396 = vunpack.c.h.b16 %v266
        %v397 = vunpack.c.l.b16 %v267
        %v398 = vunpack.c.h.b16 %v267
        %v399 = vunpack.c.l.b16 %v268
        %v400 = vunpack.c.h.b16 %v268
        %v401 = vunpack.c.l.b16 %v269
        %v402 = vunpack.c.h.b16 %v269
        %v403 = vunpack.c.l.b16 %v270
        %v404 = vunpack.c.h.b16 %v270
        %v405 = vunpack.c.l.b16 %v271
        %v406 = vunpack.c.h.b16 %v271
        %v407 = vunpack.c.l.b16 %v272
        %v408 = vunpack.c.h.b16 %v272
        %v409 = vunpack.c.l.b16 %v273
        %v410 = vunpack.c.h.b16 %v273
        %v411 = vunpack.c.l.b16 %v274
        %v412 = vunpack.c.h.b16 %v274
        %v413 = vunpack.c.l.b16 %v275
        %v414 = vunpack.c.h.b16 %v275
        %v415 = vunpack.c.l.b16 %v276
        %v416 = vunpack.c.h.b16 %v276
        %v417 = vunpack.c.l.b16 %v277
        %v418 = vunpack.c.h.b16 %v277
        %v419 = vunpack.c.l.b16 %v278
        %v420 = vunpack.c.h.b16 %v278
        %v421 = vunpack.c.l.b16 %v279
        %v422 = vunpack.c.h.b16 %v279
        %v423 = vunpack.c.l.b16 %v280
        %v424 = vunpack.c.h.b16 %v280
        %v425 = vpack.c.b16 %v335, %v329
        %v426 = vpack.c.b16 %v336, %v330
        %v427 = vpack.c.b16 %v337, %v331
        %v428 = vpack.c.b16 %v338, %v332
        %v429 = vpack.c.b16 %v339, %v333
        %v430 = vpack.c.b16 %v340, %v334
        %v431 = vpack.c.b16 %v347, %v341
        %v432 = vpack.c.b16 %v348, %v342
        %v433 = vpack.c.b16 %v349, %v343
        %v434 = vpack.c.b16 %v350, %v344
        %v435 = vpack.c.b16 %v351, %v345
        %v436 = vpack.c.b16 %v352, %v346
        %v437 = vpack.c.b16 %v359, %v353
        %v438 = vpack.c.b16 %v360, %v354
        %v439 = vpack.c.b16 %v361, %v355
        %v440 = vpack.c.b16 %v362, %v356
        %v441 = vpack.c.b16 %v363, %v357
        %v442 = vpack.c.b16 %v364, %v358
        %v443 = vpack.c.b16 %v371, %v365
        %v444 = vpack.c.b16 %v372, %v366
        %v445 = vpack.c.b16 %v373, %v367
        %v446 = vpack.c.b16 %v374, %v368
        %v447 = vpack.c.b16 %v375, %v369
        %v448 = vpack.c.b16 %v376, %v370
        %v449 = vpack.c.b16 %v383, %v377
        %v450 = vpack.c.b16 %v384, %v378
        %v451 = vpack.c.b16 %v385, %v379
        %v452 = vpack.c.b16 %v386, %v380
        %v453 = vpack.c.b16 %v387, %v381
        %v454 = vpack.c.b16 %v388, %v382
        %v455 = vpack.c.b16 %v395, %v389
        %v456 = vpack.c.b16 %v396, %v390
        %v457 = vpack.c.b16 %v397, %v391
        %v458 = vpack.c.b16 %v398, %v392
        %v459 = vpack.c.b16 %v399, %v393
        %v460 = vpack.c.b16 %v400, %v394
        %v461 = vpack.c.b16 %v407, %v401
        %v462 = vpack.c.b16 %v408, %v402
        %v463 = vpack.c.b16 %v409, %v403
        %v464 = vpack.c.b16 %v410, %v404
        %v465 = vpack.c.b16 %v411, %v405
        %v466 = vpack.c.b16 %v412, %v406
        %v467 = vpack.c.b16 %v419, %v413
        %v468 = vpack.c.b16 %v420, %v414
        %v469 = vpack.c.b16 %v421, %v415
        %v470 = vpack.c.b16 %v422, %v416
        %v471 = vpack.c.b16 %v423, %v417
        %v472 = vpack.c.b16 %v424, %v418
        %521 = vmatprep.subr.bf16.mxu0 %v426
        %522 = vmatpush1.bf16.msra.mxu0 %v425
        %523 = vmatprep.subr.bf16.mxu0 %v432
        %524 = vmatpush1.bf16.msra.mxu0 %v431
        %525 = vmatprep.subr.bf16.mxu0 %v438
        %526 = vmatpush1.bf16.msra.mxu0 %v437
        %527 = vmatprep.subr.bf16.mxu0 %v444
        %528 = vmatpush1.bf16.msra.mxu0 %v443
        %529 = vmatprep.subr.bf16.mxu0 %v450
        %530 = vmatpush1.bf16.msra.mxu0 %v449
        %531 = vmatprep.subr.bf16.mxu0 %v456
        %532 = vmatpush1.bf16.msra.mxu0 %v455
        %533 = vmatprep.subr.bf16.mxu0 %v462
        %534 = vmatpush1.bf16.msra.mxu0 %v461
        %535 = vmatprep.subr.bf16.mxu0 %v468
        %536 = vmatpush1.bf16.msra.mxu0 %v467
        %537 = vmatprep.subr.bf16.mxu0 0
        %538 = vmatpush1.bf16.msra.mxu0 0
        %539 = vmatprep.subr.bf16.mxu0 0
        %540 = vmatpush1.bf16.msra.mxu0 0
        %541 = vmatprep.subr.bf16.mxu0 0
        %542 = vmatpush1.bf16.msra.mxu0 0
        %543 = vmatprep.subr.bf16.mxu0 0
        %544 = vmatpush1.bf16.msra.mxu0 0
        %545 = vmatprep.subr.bf16.mxu0 0
        %546 = vmatpush1.bf16.msra.mxu0 0
        %547 = vmatprep.subr.bf16.mxu0 0
        %548 = vmatpush1.bf16.msra.mxu0 0
        %549 = vmatprep.subr.bf16.mxu0 0
        %550 = vmatpush1.bf16.msra.mxu0 0
        %551 = vmatprep.subr.bf16.mxu0 0
        %552 = vmatpush1.bf16.msra.mxu0 0
        %553 = vmatprep.mubr.bf16.mxu0 0
        %554 = vmatmul.mubr.bf16.gmra.mrb[0].mxu0 %v232
        %v555 = vpop.f32.mrb[0].mxu0
        %v556 = vadd.f32 0.0, %v555
        %v557 = vpop.f32.mrb[0].mxu0
        %v558 = vadd.f32 0.0, %v557
        %v559 = vpop.f32.mrb[0].mxu0
        %v560 = vpop.f32.mrb[0].mxu0
        %561 = vdwg.mxu0
        %562 = vmatprep.subr.bf16.mxu0 %v428
        %563 = vmatpush1.bf16.msra.mxu0 %v427
        %564 = vmatprep.subr.bf16.mxu0 %v434
        %565 = vmatpush1.bf16.msra.mxu0 %v433
        %566 = vmatprep.subr.bf16.mxu0 %v440
        %567 = vmatpush1.bf16.msra.mxu0 %v439
        %568 = vmatprep.subr.bf16.mxu0 %v446
        %569 = vmatpush1.bf16.msra.mxu0 %v445
        %570 = vmatprep.subr.bf16.mxu0 %v452
        %571 = vmatpush1.bf16.msra.mxu0 %v451
        %572 = vmatprep.subr.bf16.mxu0 %v458
        %573 = vmatpush1.bf16.msra.mxu0 %v457
        %574 = vmatprep.subr.bf16.mxu0 %v464
        %575 = vmatpush1.bf16.msra.mxu0 %v463
        %576 = vmatprep.subr.bf16.mxu0 %v470
        %577 = vmatpush1.bf16.msra.mxu0 %v469
        %578 = vmatprep.subr.bf16.mxu0 0
        %579 = vmatpush1.bf16.msra.mxu0 0
        %580 = vmatprep.subr.bf16.mxu0 0
        %581 = vmatpush1.bf16.msra.mxu0 0
        %582 = vmatprep.subr.bf16.mxu0 0
        %583 = vmatpush1.bf16.msra.mxu0 0
        %584 = vmatprep.subr.bf16.mxu0 0
        %585 = vmatpush1.bf16.msra.mxu0 0
        %586 = vmatprep.subr.bf16.mxu0 0
        %587 = vmatpush1.bf16.msra.mxu0 0
        %588 = vmatprep.subr.bf16.mxu0 0
        %589 = vmatpush1.bf16.msra.mxu0 0
        %590 = vmatprep.subr.bf16.mxu0 0
        %591 = vmatpush1.bf16.msra.mxu0 0
        %592 = vmatprep.subr.bf16.mxu0 0
        %593 = vmatpush1.bf16.msra.mxu0 0
        %594 = vmatprep.mubr.bf16.mxu0 0
        %595 = vmatmul.mubr.bf16.gmra.mrb[0].mxu0 %v232
        %v596 = vpop.f32.mrb[0].mxu0
        %v597 = vadd.f32 0.0, %v596
        %v598 = vpop.f32.mrb[0].mxu0
        %v599 = vadd.f32 0.0, %v598
        %v600 = vpop.f32.mrb[0].mxu0
        %v601 = vpop.f32.mrb[0].mxu0
        %602 = vdwg.mxu0
        %603 = vmatprep.subr.bf16.mxu0 %v430
        %604 = vmatpush1.bf16.msra.mxu0 %v429
        %605 = vmatprep.subr.bf16.mxu0 %v436
        %606 = vmatpush1.bf16.msra.mxu0 %v435
        %607 = vmatprep.subr.bf16.mxu0 %v442
        %608 = vmatpush1.bf16.msra.mxu0 %v441
        %609 = vmatprep.subr.bf16.mxu0 %v448
        %610 = vmatpush1.bf16.msra.mxu0 %v447
        %611 = vmatprep.subr.bf16.mxu0 %v454
        %612 = vmatpush1.bf16.msra.mxu0 %v453
        %613 = vmatprep.subr.bf16.mxu0 %v460
        %614 = vmatpush1.bf16.msra.mxu0 %v459
        %615 = vmatprep.subr.bf16.mxu0 %v466
        %616 = vmatpush1.bf16.msra.mxu0 %v465
        %617 = vmatprep.subr.bf16.mxu0 %v472
        %618 = vmatpush1.bf16.msra.mxu0 %v471
        %619 = vmatprep.subr.bf16.mxu0 0
        %620 = vmatpush1.bf16.msra.mxu0 0
        %621 = vmatprep.subr.bf16.mxu0 0
        %622 = vmatpush1.bf16.msra.mxu0 0
        %623 = vmatprep.subr.bf16.mxu0 0
        %624 = vmatpush1.bf16.msra.mxu0 0
        %625 = vmatprep.subr.bf16.mxu0 0
        %626 = vmatpush1.bf16.msra.mxu0 0
        %627 = vmatprep.subr.bf16.mxu0 0
        %628 = vmatpush1.bf16.msra.mxu0 0
        %629 = vmatprep.subr.bf16.mxu0 0
        %630 = vmatpush1.bf16.msra.mxu0 0
        %631 = vmatprep.subr.bf16.mxu0 0
        %632 = vmatpush1.bf16.msra.mxu0 0
        %633 = vmatprep.subr.bf16.mxu0 0
        %634 = vmatpush1.bf16.msra.mxu0 0
        %635 = vmatprep.mubr.bf16.mxu0 0
        %636 = vmatmul.mubr.bf16.gmra.mrb[0].mxu0 %v232
        %v637 = vpop.f32.mrb[0].mxu0
        %v638 = vadd.f32 0.0, %v637
        %v639 = vpop.f32.mrb[0].mxu0
        %v640 = vadd.f32 0.0, %v639
        %v641 = vpop.f32.mrb[0].mxu0
        %v642 = vpop.f32.mrb[0].mxu0
        %643 = vdwg.mxu0
        %v644 = vpack.c.bf16 %v556, %v556
        %v645 = vpack.c.bf16 %v558, %v558
        %v646 = vpack.c.bf16 %v597, %v597
        %v647 = vpack.c.bf16 %v599, %v599
        %v648 = vpack.c.bf16 %v638, %v638
        %v649 = vpack.c.bf16 %v640, %v640
        %v650 = vld [vmem:[#allocation5] sm:$0xf]
        %v651 = vld [vmem:[#allocation5 + $0x4] sm:$0xf]
        %v652 = vld [vmem:[#allocation5 + $0x8] sm:$0xf]
        %v653 = vld [vmem:[#allocation5 + $0xc] sm:$0xf]
        %v654 = vld [vmem:[#allocation5 + $0x10] sm:$0xf]
        %v655 = vld [vmem:[#allocation5 + $0x14] sm:$0xf]
        %v656 = vld [vmem:[#allocation5 + $0x18] sm:$0xf]
        %v657 = vld [vmem:[#allocation5 + $0x1c] sm:$0xf]
        %v658 = vld [vmem:[#allocation5 + $0x20] sm:$0xf]
        %v659 = vld [vmem:[#allocation5 + $0x24] sm:$0xf]
        %v660 = vld [vmem:[#allocation5 + $0x28] sm:$0xf]
        %v661 = vld [vmem:[#allocation5 + $0x2c] sm:$0xf]
        %v662 = vld [vmem:[#allocation5 + $0x30] sm:$0xf]
        %v663 = vld [vmem:[#allocation5 + $0x34] sm:$0xf]
        %v664 = vld [vmem:[#allocation5 + $0x38] sm:$0xf]
        %v665 = vld [vmem:[#allocation5 + $0x3c] sm:$0xf]
        %v666 = vld [vmem:[#allocation5 + $0x40] sm:$0xf]
        %v667 = vld [vmem:[#allocation5 + $0x44] sm:$0xf]
        %v668 = vld [vmem:[#allocation5 + $0x48] sm:$0xf]
        %v669 = vld [vmem:[#allocation5 + $0x4c] sm:$0xf]
        %v670 = vld [vmem:[#allocation5 + $0x50] sm:$0xf]
        %v671 = vld [vmem:[#allocation5 + $0x54] sm:$0xf]
        %v672 = vld [vmem:[#allocation5 + $0x58] sm:$0xf]
        %v673 = vld [vmem:[#allocation5 + $0x5c] sm:$0xf]
        %v674 = vld [vmem:[#allocation5 + $0x60] sm:$0xf]
        %v675 = vld [vmem:[#allocation5 + $0x64] sm:$0xf]
        %v676 = vld [vmem:[#allocation5 + $0x68] sm:$0xf]
        %v677 = vld [vmem:[#allocation5 + $0x6c] sm:$0xf]
        %v678 = vld [vmem:[#allocation5 + $0x70] sm:$0xf]
        %v679 = vld [vmem:[#allocation5 + $0x74] sm:$0xf]
        %v680 = vld [vmem:[#allocation5 + $0x78] sm:$0xf]
        %v681 = vld [vmem:[#allocation5 + $0x7c] sm:$0xf]
        %v682 = vld [vmem:[#allocation5 + $0x80] sm:$0xf]
        %v683 = vld [vmem:[#allocation5 + $0x84] sm:$0xf]
        %v684 = vld [vmem:[#allocation5 + $0x88] sm:$0xf]
        %v685 = vld [vmem:[#allocation5 + $0x8c] sm:$0xf]
        %v686 = vld [vmem:[#allocation5 + $0x90] sm:$0xf]
        %v687 = vld [vmem:[#allocation5 + $0x94] sm:$0xf]
        %v688 = vld [vmem:[#allocation5 + $0x98] sm:$0xf]
        %v689 = vld [vmem:[#allocation5 + $0x9c] sm:$0xf]
        %v690 = vld [vmem:[#allocation5 + $0xa0] sm:$0xf]
        %v691 = vld [vmem:[#allocation5 + $0xa4] sm:$0xf]
        %v692 = vld [vmem:[#allocation5 + $0xa8] sm:$0xf]
        %v693 = vld [vmem:[#allocation5 + $0xac] sm:$0xf]
        %v694 = vld [vmem:[#allocation5 + $0xb0] sm:$0xf]
        %v695 = vld [vmem:[#allocation5 + $0xb4] sm:$0xf]
        %v696 = vld [vmem:[#allocation5 + $0xb8] sm:$0xf]
        %v697 = vld [vmem:[#allocation5 + $0xbc] sm:$0xf]
        %v698 = vld [vmem:[#allocation5 + $0xc0] sm:$0xf]
        %v699 = vld [vmem:[#allocation5 + $0xc4] sm:$0xf]
        %v700 = vld [vmem:[#allocation5 + $0xc8] sm:$0xf]
        %v701 = vld [vmem:[#allocation5 + $0xcc] sm:$0xf]
        %v702 = vld [vmem:[#allocation5 + $0xd0] sm:$0xf]
        %v703 = vld [vmem:[#allocation5 + $0xd4] sm:$0xf]
        %v704 = vld [vmem:[#allocation5 + $0xd8] sm:$0xf]
        %v705 = vld [vmem:[#allocation5 + $0xdc] sm:$0xf]
        %v706 = vld [vmem:[#allocation5 + $0xe0] sm:$0xf]
        %v707 = vld [vmem:[#allocation5 + $0xe4] sm:$0xf]
        %v708 = vld [vmem:[#allocation5 + $0xe8] sm:$0xf]
        %v709 = vld [vmem:[#allocation5 + $0xec] sm:$0xf]
        %v710 = vld [vmem:[#allocation5 + $0xf0] sm:$0xf]
        %v711 = vld [vmem:[#allocation5 + $0xf4] sm:$0xf]
        %v712 = vld [vmem:[#allocation5 + $0xf8] sm:$0xf]
        %v713 = vld [vmem:[#allocation5 + $0xfc] sm:$0xf]
        %v714 = vld [vmem:[#allocation5 + $0x100] sm:$0xf]
        %v715 = vld [vmem:[#allocation5 + $0x104] sm:$0xf]
        %v716 = vld [vmem:[#allocation5 + $0x108] sm:$0xf]
        %v717 = vld [vmem:[#allocation5 + $0x10c] sm:$0xf]
        %v718 = vld [vmem:[#allocation5 + $0x110] sm:$0xf]
        %v719 = vld [vmem:[#allocation5 + $0x114] sm:$0xf]
        %v720 = vld [vmem:[#allocation5 + $0x118] sm:$0xf]
        %v721 = vld [vmem:[#allocation5 + $0x11c] sm:$0xf]
        %v722 = vld [vmem:[#allocation5 + $0x120] sm:$0xf]
        %v723 = vld [vmem:[#allocation5 + $0x124] sm:$0xf]
        %v724 = vld [vmem:[#allocation5 + $0x128] sm:$0xf]
        %v725 = vld [vmem:[#allocation5 + $0x12c] sm:$0xf]
        %v726 = vld [vmem:[#allocation5 + $0x130] sm:$0xf]
        %v727 = vld [vmem:[#allocation5 + $0x134] sm:$0xf]
        %v728 = vld [vmem:[#allocation5 + $0x138] sm:$0xf]
        %v729 = vld [vmem:[#allocation5 + $0x13c] sm:$0xf]
        %v730 = vld [vmem:[#allocation5 + $0x140] sm:$0xf]
        %v731 = vld [vmem:[#allocation5 + $0x144] sm:$0xf]
        %v732 = vld [vmem:[#allocation5 + $0x148] sm:$0xf]
        %v733 = vld [vmem:[#allocation5 + $0x14c] sm:$0xf]
        %v734 = vld [vmem:[#allocation5 + $0x150] sm:$0xf]
        %v735 = vld [vmem:[#allocation5 + $0x154] sm:$0xf]
        %v736 = vld [vmem:[#allocation5 + $0x158] sm:$0xf]
        %v737 = vld [vmem:[#allocation5 + $0x15c] sm:$0xf]
        %v738 = vld [vmem:[#allocation5 + $0x160] sm:$0xf]
        %v739 = vld [vmem:[#allocation5 + $0x164] sm:$0xf]
        %v740 = vld [vmem:[#allocation5 + $0x168] sm:$0xf]
        %v741 = vld [vmem:[#allocation5 + $0x16c] sm:$0xf]
        %v742 = vld [vmem:[#allocation5 + $0x170] sm:$0xf]
        %v743 = vld [vmem:[#allocation5 + $0x174] sm:$0xf]
        %v744 = vld [vmem:[#allocation5 + $0x178] sm:$0xf]
        %v745 = vld [vmem:[#allocation5 + $0x17c] sm:$0xf]
        %v746 = vld [vmem:[%s3] sm:$0x1]
        %v748 = vlaneseq
        %v749 = vshrl.u32 %v748, 7
        %v750 = vsub.s32 0, %v749
        %v751 = vrot.slane %v746, %v750
        %v849 = vunpack.c.l.b16 %v650
        %v850 = vunpack.c.l.b16 %v651
        %v851 = vunpack.c.l.b16 %v652
        %v852 = vunpack.c.l.b16 %v653
        %v853 = vunpack.c.l.b16 %v654
        %v854 = vunpack.c.l.b16 %v655
        %v855 = vunpack.c.l.b16 %v656
        %v856 = vunpack.c.l.b16 %v657
        %v857 = vunpack.c.l.b16 %v658
        %v858 = vunpack.c.l.b16 %v659
        %v859 = vunpack.c.l.b16 %v660
        %v860 = vunpack.c.l.b16 %v661
        %v861 = vunpack.c.l.b16 %v662
        %v862 = vunpack.c.l.b16 %v663
        %v863 = vunpack.c.l.b16 %v664
        %v864 = vunpack.c.l.b16 %v665
        %v865 = vunpack.c.l.b16 %v666
        %v866 = vunpack.c.l.b16 %v667
        %v867 = vunpack.c.l.b16 %v668
        %v868 = vunpack.c.l.b16 %v669
        %v869 = vunpack.c.l.b16 %v670
        %v870 = vunpack.c.l.b16 %v671
        %v871 = vunpack.c.l.b16 %v672
        %v872 = vunpack.c.l.b16 %v673
        %v873 = vunpack.c.l.b16 %v674
        %v874 = vunpack.c.l.b16 %v675
        %v875 = vunpack.c.l.b16 %v676
        %v876 = vunpack.c.l.b16 %v677
        %v877 = vunpack.c.l.b16 %v678
        %v878 = vunpack.c.l.b16 %v679
        %v879 = vunpack.c.l.b16 %v680
        %v880 = vunpack.c.l.b16 %v681
        %v881 = vunpack.c.l.b16 %v682
        %v882 = vunpack.c.l.b16 %v683
        %v883 = vunpack.c.l.b16 %v684
        %v884 = vunpack.c.l.b16 %v685
        %v885 = vunpack.c.l.b16 %v686
        %v886 = vunpack.c.l.b16 %v687
        %v887 = vunpack.c.l.b16 %v688
        %v888 = vunpack.c.l.b16 %v689
        %v889 = vunpack.c.l.b16 %v690
        %v890 = vunpack.c.l.b16 %v691
        %v891 = vunpack.c.l.b16 %v692
        %v892 = vunpack.c.l.b16 %v693
        %v893 = vunpack.c.l.b16 %v694
        %v894 = vunpack.c.l.b16 %v695
        %v895 = vunpack.c.l.b16 %v696
        %v896 = vunpack.c.l.b16 %v697
        %v897 = vunpack.c.l.b16 %v698
        %v898 = vunpack.c.l.b16 %v699
        %v899 = vunpack.c.l.b16 %v700
        %v900 = vunpack.c.l.b16 %v701
        %v901 = vunpack.c.l.b16 %v702
        %v902 = vunpack.c.l.b16 %v703
        %v903 = vunpack.c.l.b16 %v704
        %v904 = vunpack.c.l.b16 %v705
        %v905 = vunpack.c.l.b16 %v706
        %v906 = vunpack.c.l.b16 %v707
        %v907 = vunpack.c.l.b16 %v708
        %v908 = vunpack.c.l.b16 %v709
        %v909 = vunpack.c.l.b16 %v710
        %v910 = vunpack.c.l.b16 %v711
        %v911 = vunpack.c.l.b16 %v712
        %v912 = vunpack.c.l.b16 %v713
        %v913 = vunpack.c.l.b16 %v714
        %v914 = vunpack.c.l.b16 %v715
        %v915 = vunpack.c.l.b16 %v716
        %v916 = vunpack.c.l.b16 %v717
        %v917 = vunpack.c.l.b16 %v718
        %v918 = vunpack.c.l.b16 %v719
        %v919 = vunpack.c.l.b16 %v720
        %v920 = vunpack.c.l.b16 %v721
        %v921 = vunpack.c.l.b16 %v722
        %v922 = vunpack.c.l.b16 %v723
        %v923 = vunpack.c.l.b16 %v724
        %v924 = vunpack.c.l.b16 %v725
        %v925 = vunpack.c.l.b16 %v726
        %v926 = vunpack.c.l.b16 %v727
        %v927 = vunpack.c.l.b16 %v728
        %v928 = vunpack.c.l.b16 %v729
        %v929 = vunpack.c.l.b16 %v730
        %v930 = vunpack.c.l.b16 %v731
        %v931 = vunpack.c.l.b16 %v732
        %v932 = vunpack.c.l.b16 %v733
        %v933 = vunpack.c.l.b16 %v734
        %v934 = vunpack.c.l.b16 %v735
        %v935 = vunpack.c.l.b16 %v736
        %v936 = vunpack.c.l.b16 %v737
        %v937 = vunpack.c.l.b16 %v738
        %v938 = vunpack.c.l.b16 %v739
        %v939 = vunpack.c.l.b16 %v740
        %v940 = vunpack.c.l.b16 %v741
        %v941 = vunpack.c.l.b16 %v742
        %v942 = vunpack.c.l.b16 %v743
        %v943 = vunpack.c.l.b16 %v744
        %v944 = vunpack.c.l.b16 %v745
        %v945 = vpack.c.b16 %v850, %v849
        %v946 = vpack.c.b16 %v852, %v851
        %v947 = vpack.c.b16 %v854, %v853
        %v948 = vpack.c.b16 %v856, %v855
        %v949 = vpack.c.b16 %v858, %v857
        %v950 = vpack.c.b16 %v860, %v859
        %v951 = vpack.c.b16 %v862, %v861
        %v952 = vpack.c.b16 %v864, %v863
        %v953 = vpack.c.b16 %v866, %v865
        %v954 = vpack.c.b16 %v868, %v867
        %v955 = vpack.c.b16 %v870, %v869
        %v956 = vpack.c.b16 %v872, %v871
        %v957 = vpack.c.b16 %v874, %v873
        %v958 = vpack.c.b16 %v876, %v875
        %v959 = vpack.c.b16 %v878, %v877
        %v960 = vpack.c.b16 %v880, %v879
        %v961 = vpack.c.b16 %v882, %v881
        %v962 = vpack.c.b16 %v884, %v883
        %v963 = vpack.c.b16 %v886, %v885
        %v964 = vpack.c.b16 %v888, %v887
        %v965 = vpack.c.b16 %v890, %v889
        %v966 = vpack.c.b16 %v892, %v891
        %v967 = vpack.c.b16 %v894, %v893
        %v968 = vpack.c.b16 %v896, %v895
        %v969 = vpack.c.b16 %v898, %v897
        %v970 = vpack.c.b16 %v900, %v899
        %v971 = vpack.c.b16 %v902, %v901
        %v972 = vpack.c.b16 %v904, %v903
        %v973 = vpack.c.b16 %v906, %v905
        %v974 = vpack.c.b16 %v908, %v907
        %v975 = vpack.c.b16 %v910, %v909
        %v976 = vpack.c.b16 %v912, %v911
        %v977 = vpack.c.b16 %v914, %v913
        %v978 = vpack.c.b16 %v916, %v915
        %v979 = vpack.c.b16 %v918, %v917
        %v980 = vpack.c.b16 %v920, %v919
        %v981 = vpack.c.b16 %v922, %v921
        %v982 = vpack.c.b16 %v924, %v923
        %v983 = vpack.c.b16 %v926, %v925
        %v984 = vpack.c.b16 %v928, %v927
        %v985 = vpack.c.b16 %v930, %v929
        %v986 = vpack.c.b16 %v932, %v931
        %v987 = vpack.c.b16 %v934, %v933
        %v988 = vpack.c.b16 %v936, %v935
        %v989 = vpack.c.b16 %v938, %v937
        %v990 = vpack.c.b16 %v940, %v939
        %v991 = vpack.c.b16 %v942, %v941
        %v992 = vpack.c.b16 %v944, %v943
        %1041 = vmatprep.subr.bf16.mxu0 0
        %1042 = vmatpush1.bf16.msra.mxu0 %v945
        %1043 = vmatprep.subr.bf16.mxu0 0
        %1044 = vmatpush1.bf16.msra.mxu0 %v946
        %1045 = vmatprep.subr.bf16.mxu0 0
        %1046 = vmatpush1.bf16.msra.mxu0 %v947
        %1047 = vmatprep.subr.bf16.mxu0 0
        %1048 = vmatpush1.bf16.msra.mxu0 %v948
        %1049 = vmatprep.subr.bf16.mxu0 0
        %1050 = vmatpush1.bf16.msra.mxu0 %v949
        %1051 = vmatprep.subr.bf16.mxu0 0
        %1052 = vmatpush1.bf16.msra.mxu0 %v950
        %1053 = vmatprep.subr.bf16.mxu0 0
        %1054 = vmatpush1.bf16.msra.mxu0 %v951
        %1055 = vmatprep.subr.bf16.mxu0 0
        %1056 = vmatpush1.bf16.msra.mxu0 %v952
        %1057 = vmatprep.subr.bf16.mxu0 0
        %1058 = vmatpush1.bf16.msra.mxu0 %v953
        %1059 = vmatprep.subr.bf16.mxu0 0
        %1060 = vmatpush1.bf16.msra.mxu0 %v954
        %1061 = vmatprep.subr.bf16.mxu0 0
        %1062 = vmatpush1.bf16.msra.mxu0 %v955
        %1063 = vmatprep.subr.bf16.mxu0 0
        %1064 = vmatpush1.bf16.msra.mxu0 %v956
        %1065 = vmatprep.subr.bf16.mxu0 0
        %1066 = vmatpush1.bf16.msra.mxu0 %v957
        %1067 = vmatprep.subr.bf16.mxu0 0
        %1068 = vmatpush1.bf16.msra.mxu0 %v958
        %1069 = vmatprep.subr.bf16.mxu0 0
        %1070 = vmatpush1.bf16.msra.mxu0 %v959
        %1071 = vmatprep.subr.bf16.mxu0 0
        %1072 = vmatpush1.bf16.msra.mxu0 %v960
        %1073 = vmatprep.mubr.bf16.mxu0 %v645
        %1074 = vmatmul.mubr.bf16.gmra.mrb[0].mxu0 %v644
        %v1075 = vpop.f32.mrb[0].mxu0
        %v1076 = vadd.f32 %v751, %v1075
        %v1077 = vpop.f32.mrb[0].mxu0
        %v1078 = vpop.f32.mrb[0].mxu0
        %v1079 = vpop.f32.mrb[0].mxu0
        %1080 = vdwg.mxu0
        %1081 = vmatprep.subr.bf16.mxu0 0
        %1082 = vmatpush1.bf16.msra.mxu0 %v961
        %1083 = vmatprep.subr.bf16.mxu0 0
        %1084 = vmatpush1.bf16.msra.mxu0 %v962
        %1085 = vmatprep.subr.bf16.mxu0 0
        %1086 = vmatpush1.bf16.msra.mxu0 %v963
        %1087 = vmatprep.subr.bf16.mxu0 0
        %1088 = vmatpush1.bf16.msra.mxu0 %v964
        %1089 = vmatprep.subr.bf16.mxu0 0
        %1090 = vmatpush1.bf16.msra.mxu0 %v965
        %1091 = vmatprep.subr.bf16.mxu0 0
        %1092 = vmatpush1.bf16.msra.mxu0 %v966
        %1093 = vmatprep.subr.bf16.mxu0 0
        %1094 = vmatpush1.bf16.msra.mxu0 %v967
        %1095 = vmatprep.subr.bf16.mxu0 0
        %1096 = vmatpush1.bf16.msra.mxu0 %v968
        %1097 = vmatprep.subr.bf16.mxu0 0
        %1098 = vmatpush1.bf16.msra.mxu0 %v969
        %1099 = vmatprep.subr.bf16.mxu0 0
        %1100 = vmatpush1.bf16.msra.mxu0 %v970
        %1101 = vmatprep.subr.bf16.mxu0 0
        %1102 = vmatpush1.bf16.msra.mxu0 %v971
        %1103 = vmatprep.subr.bf16.mxu0 0
        %1104 = vmatpush1.bf16.msra.mxu0 %v972
        %1105 = vmatprep.subr.bf16.mxu0 0
        %1106 = vmatpush1.bf16.msra.mxu0 %v973
        %1107 = vmatprep.subr.bf16.mxu0 0
        %1108 = vmatpush1.bf16.msra.mxu0 %v974
        %1109 = vmatprep.subr.bf16.mxu0 0
        %1110 = vmatpush1.bf16.msra.mxu0 %v975
        %1111 = vmatprep.subr.bf16.mxu0 0
        %1112 = vmatpush1.bf16.msra.mxu0 %v976
        %1113 = vmatprep.mubr.bf16.mxu0 %v647
        %1114 = vmatmul.mubr.bf16.gmra.mrb[0].mxu0 %v646
        %v1115 = vpop.f32.mrb[0].mxu0
        %v1116 = vadd.f32 %v1076, %v1115
        %v1117 = vpop.f32.mrb[0].mxu0
        %v1118 = vpop.f32.mrb[0].mxu0
        %v1119 = vpop.f32.mrb[0].mxu0
        %1120 = vdwg.mxu0
        %1121 = vmatprep.subr.bf16.mxu0 0
        %1122 = vmatpush1.bf16.msra.mxu0 %v977
        %1123 = vmatprep.subr.bf16.mxu0 0
        %1124 = vmatpush1.bf16.msra.mxu0 %v978
        %1125 = vmatprep.subr.bf16.mxu0 0
        %1126 = vmatpush1.bf16.msra.mxu0 %v979
        %1127 = vmatprep.subr.bf16.mxu0 0
        %1128 = vmatpush1.bf16.msra.mxu0 %v980
        %1129 = vmatprep.subr.bf16.mxu0 0
        %1130 = vmatpush1.bf16.msra.mxu0 %v981
        %1131 = vmatprep.subr.bf16.mxu0 0
        %1132 = vmatpush1.bf16.msra.mxu0 %v982
        %1133 = vmatprep.subr.bf16.mxu0 0
        %1134 = vmatpush1.bf16.msra.mxu0 %v983
        %1135 = vmatprep.subr.bf16.mxu0 0
        %1136 = vmatpush1.bf16.msra.mxu0 %v984
        %1137 = vmatprep.subr.bf16.mxu0 0
        %1138 = vmatpush1.bf16.msra.mxu0 %v985
        %1139 = vmatprep.subr.bf16.mxu0 0
        %1140 = vmatpush1.bf16.msra.mxu0 %v986
        %1141 = vmatprep.subr.bf16.mxu0 0
        %1142 = vmatpush1.bf16.msra.mxu0 %v987
        %1143 = vmatprep.subr.bf16.mxu0 0
        %1144 = vmatpush1.bf16.msra.mxu0 %v988
        %1145 = vmatprep.subr.bf16.mxu0 0
        %1146 = vmatpush1.bf16.msra.mxu0 %v989
        %1147 = vmatprep.subr.bf16.mxu0 0
        %1148 = vmatpush1.bf16.msra.mxu0 %v990
        %1149 = vmatprep.subr.bf16.mxu0 0
        %1150 = vmatpush1.bf16.msra.mxu0 %v991
        %1151 = vmatprep.subr.bf16.mxu0 0
        %1152 = vmatpush1.bf16.msra.mxu0 %v992
        %1153 = vmatprep.mubr.bf16.mxu0 %v649
        %1154 = vmatmul.mubr.bf16.gmra.mrb[0].mxu0 %v648
        %v1155 = vpop.f32.mrb[0].mxu0
        %v1156 = vadd.f32 %v1116, %v1155
        %v1157 = vpop.f32.mrb[0].mxu0
        %v1158 = vpop.f32.mrb[0].mxu0
        %v1159 = vpop.f32.mrb[0].mxu0
        %1160 = vdwg.mxu0
        %1161 = vst [vmem:[%s218] sm:$0xff] %v1156
        %s1162 = sand.u32 %s117, 1
        %s1163 = scalar_lea.sflag [#allocation4], %s1162
        %s1164 = sand.u32 %s117, 1
        %s1165 = smul.addr %s1164, 8
        %s1166 = scalar_lea.vmem [#allocation7], %s1165
        // Predicated region
        $region45: #{tpu_custom_call.1} parent=35 // pred_check
          %p1167 = pneg %p127
        $region46: #{tpu_custom_call.1} parent=35 // pred_check_branch
          %1169 = sbr.rel (%p1167) target = $region48
        $region47: #{tpu_custom_call.1} parent=35 // pred_region
          %s1171 = ssub.s32 128, 128
          %1172 = vsyncadd %s1163, %s1171
          %s1173 = smul.addr %s20, 128
          %s1174 = scalar_lea.hbm %s4, %s1173
          %s1176 = sshll.u32 %s1166, 4
          %s1177 = int_to_ptr.vmem [resolvable:$true] %s1176
          %1179 = dma.vmem_to_hbm [thread:$0]  %s1177, 128, %s1174, %s1163
        $region48: #{tpu_custom_call.1} parent=35 // pred_fallthru
          _
      $region36: #{tpu_custom_call.1} parent=5 // pred_fallthru
        _
      %p1180 = scmp.le.s32.totalorder 2, %s15
      // Predicated region
      $region49: #{tpu_custom_call.1} parent=5 // pred_check
        %p1181 = pneg %p1180
      $region50: #{tpu_custom_call.1} parent=5 // pred_check_branch
        %1183 = sbr.rel (%p1181) target = $region52
      $region51: #{tpu_custom_call.1} parent=5 // pred_region
        %s1184 = ssub.s32 %s15, 2
        // Predicated region
        $region53: #{tpu_custom_call.1} parent=51 // pred_check
          %p1185 = pneg %p133
        $region54: #{tpu_custom_call.1} parent=51 // pred_check_branch
          %1187 = sbr.rel (%p1185) target = $region56
        $region55: #{tpu_custom_call.1} parent=51 // pred_region
          %s1188 = sand.u32 %s118, 1
          %s1189 = scalar_lea.sflag [#allocation4], %s1188
          %s1190 = sand.u32 %s118, 1
          %s1191 = smul.addr %s1190, 8
          %s1192 = scalar_lea.vmem [#allocation7], %s1191
          %1193 = dma.done %s1189, 128
        $region56: #{tpu_custom_call.1} parent=51 // pred_fallthru
          _
      $region52: #{tpu_custom_call.1} parent=5 // pred_fallthru
        _
    $region6: #{tpu_custom_call.1} parent=1 // loop_footer
      %s19 = sadd.s32 1, %s15
    $region7: #{tpu_custom_call.1} parent=1 // loop_footer_branch
      %14 = sbr.rel target = $region3
    $region8: #{tpu_custom_call.1} parent=1 // loop_exit
      _
    %1194 = vsyncpa [#allocation3], 1
    %s1195 = scalar_lea.sflag [#allocation3], 1
    %1196 = vsyncpa %s1195, 1
    %1197 = vsyncpa [#allocation6], 1
    %1198 = vsyncpa [#allocation4], 1
    %s1199 = scalar_lea.sflag [#allocation4], 1
    %1200 = vsyncpa %s1199, 1

</llo_original>
